<compile_context>
chip_gen: v7x
topology: tpu7x:2x2x1
jax: 0.10.0
libtpu: 0.0.40
codegen_flags: <defaults>
</compile_context>

<pallas_src>
import jax
import jax.numpy as jnp
from jax.experimental import pallas as pl
from jax.experimental.pallas import tpu as pltpu


_LANE = 128
_SUBLANE = 16   # multiple of 16 keeps both f32 (8) and bf16 (16) packing legal


# ---------------------------------------------------------------------------
# Kernels
# ---------------------------------------------------------------------------
def _disen_kernel_smat(x_ref, w_ref, b_ref, s_ref, o_ref):
    """Fused matmul + bias + ReLU + factor-axis L2 normalize (S-matmul path)."""
    x = x_ref[...].astype(jnp.float32)
    f = jnp.dot(x, w_ref[...], preferred_element_type=jnp.float32) + b_ref[...]
    f = jnp.maximum(f, 0.0)                                   # act_fn = ReLU
    # Sum of squares over the K factors, broadcast back to every lane, as a
    # matmul against the 0/1 matrix S[i, j] = (i % d_f == j % d_f), real cols.
    ss = jnp.dot(f * f, s_ref[...], preferred_element_type=jnp.float32)
    # 1 / max(||.||, 1e-12)  ==  rsqrt(max(ss, 1e-24))  -- EUP path, no divide.
    inv = jax.lax.rsqrt(jnp.maximum(ss, 1e-24))
    o_ref[...] = (f * inv).astype(o_ref.dtype)


def _make_disen_kernel_rolls(K, d_f):
    """Variant when K*d_f is already lane-dense: the factor-axis reduction is
    done with K-1 circular rolls (XLU) + adds instead of a dk x dk matmul."""
    def kernel(x_ref, w_ref, b_ref, o_ref):
        x = x_ref[...].astype(jnp.float32)
        f = jnp.dot(x, w_ref[...], preferred_element_type=jnp.float32) + b_ref[...]
        f = jnp.maximum(f, 0.0)
        f2 = f * f
        ss = f2
        for k in range(1, K):
            ss = ss + pltpu.roll(f2, shift=k * d_f, axis=-1)
        inv = jax.lax.rsqrt(jnp.maximum(ss, 1e-24))
        o_ref[...] = (f * inv).astype(o_ref.dtype)
    return kernel


# ---------------------------------------------------------------------------
# Sizing helpers
# ---------------------------------------------------------------------------
def _round_up(x, m):
    return ((x + m - 1) // m) * m


def _vmem_limit_bytes():
    """~75% of physical VMEM: 48 MiB on v7x (64 MiB), 96 MiB on v5e/v6e (128)."""
    cap = None
    try:
        cap = getattr(pltpu.get_tpu_info(), "vmem_capacity_bytes", None)
    except Exception:
        cap = None
    if not cap:
        cap = 64 * 1024 * 1024          # conservative fallback (v7x physical)
    return int(cap) * 3 // 4


def _pick_tile_n(N, d_in, dk_pad, x_itemsize, vmem_limit, use_smat):
    """Biggest N-tile fitting the VMEM budget, >= 2 grid steps, multiple of 16."""
    # Resident operands (default double-buffered even with constant index maps).
    resident = 8 * (d_in * dk_pad + dk_pad + (dk_pad * dk_pad if use_smat else 0))
    budget = max(int(0.8 * vmem_limit) - resident, 1 << 20)
    # Per-row VMEM: double-buffered X + output tiles plus f32 kernel temporaries.
    per_row = 2 * d_in * x_itemsize + 2 * dk_pad * 4 + 4 * dk_pad * 4
    t = budget // per_row
    t = min(t, 8192)
    if N > _SUBLANE:
        t = min(t, -(-N // 2))          # >= 2 grid steps (v7x dual TensorCore)
    t = max(_SUBLANE, (t // _SUBLANE) * _SUBLANE)
    return int(min(t, N))


# ---------------------------------------------------------------------------
# Wrapper
# ---------------------------------------------------------------------------
def prepare_disen_params(disen_weights, disen_bias):
    """Pack (K, d_0, d_f) weights / (1, K, d_f) bias into lane-dense operands.
    Done once at init time (not rebuilt per forward call)."""
    K, d_0, d_f = disen_weights.shape
    dk = K * d_f
    dk_pad = max(_LANE, _round_up(dk, _LANE))

    # (K, d_0, d_f) -> (d_0, K*d_f): column k*d_f + l holds W[k, :, l].
    w_cat = jnp.transpose(disen_weights.astype(jnp.float32), (1, 0, 2)).reshape(d_0, dk)
    b_cat = disen_bias.astype(jnp.float32).reshape(1, dk)
    if dk_pad != dk:
        w_cat = jnp.pad(w_cat, ((0, 0), (0, dk_pad - dk)))
        b_cat = jnp.pad(b_cat, ((0, 0), (0, dk_pad - dk)))
        # Factor-sum / broadcast matrix restricted to the real columns.
        col = jnp.arange(dk_pad, dtype=jnp.int32)
        same = (col[:, None] % d_f) == (col[None, :] % d_f)
        real = (col[:, None] < dk) & (col[None, :] < dk)
        s_mat = (same & real).astype(jnp.float32)
    else:
        s_mat = None      # lane-dense already: use the pltpu.roll reduction
    return w_cat, b_cat, s_mat, dict(K=K, d_f=d_f, dk=dk, dk_pad=dk_pad)


def _apply(X, w_cat, b_cat, s_mat, *, K, d_f, dk, dk_pad, tile_n=None):
    N, d_in = X.shape
    assert w_cat.shape[0] == d_in, (
        "einsum 'ij,kjl->ikl' requires X.shape[1] == disen_weights.shape[1]")
    use_smat = s_mat is not None
    x_itemsize = jnp.dtype(X.dtype).itemsize
    vmem_limit = _vmem_limit_bytes()

    if tile_n is None:
        tile_n = _pick_tile_n(N, d_in, dk_pad, x_itemsize, vmem_limit, use_smat)
    else:
        tile_n = min(int(tile_n), N)
        if tile_n != N:
            tile_n = max(_SUBLANE, (tile_n // _SUBLANE) * _SUBLANE)

    grid = (pl.cdiv(N, tile_n),)

    in_specs = [
        pl.BlockSpec((tile_n, d_in), lambda i: (i, 0)),       # X: tiled over N
        pl.BlockSpec((d_in, dk_pad), lambda i: (0, 0)),       # w_cat: resident
        pl.BlockSpec((1, dk_pad), lambda i: (0, 0)),          # bias: resident
    ]
    args = [X, w_cat, b_cat]
    if use_smat:
        in_specs.append(pl.BlockSpec((dk_pad, dk_pad), lambda i: (0, 0)))
        args.append(s_mat)
        kernel = _disen_kernel_smat
    else:
        kernel = _make_disen_kernel_rolls(K, d_f)

    flops = 2 * N * d_in * dk_pad + 6 * N * dk_pad
    if use_smat:
        flops += 2 * N * dk_pad * dk_pad
    bytes_accessed = (N * d_in * x_itemsize + N * dk_pad * 4
                      + 4 * (d_in * dk_pad + dk_pad
                             + (dk_pad * dk_pad if use_smat else 0)))
    cost = pl.CostEstimate(flops=int(flops),
                           transcendentals=int(N * dk_pad),
                           bytes_accessed=int(bytes_accessed))

    out = pl.pallas_call(
        kernel,
        grid=grid,
        in_specs=in_specs,
        out_specs=pl.BlockSpec((tile_n, dk_pad), lambda i: (i, 0)),
        out_shape=jax.ShapeDtypeStruct((N, dk_pad), jnp.float32),
        compiler_params=pltpu.CompilerParams(
            dimension_semantics=("parallel",),
            vmem_limit_bytes=int(vmem_limit),
        ),
        cost_estimate=cost,
    )(*args)

    if dk_pad != dk:
        out = out[:, :dk]
    return out.reshape(N, K, d_f)


def make_init_disen_forward(disen_weights, disen_bias, *, tile_n=None):
    """Prepare parameters once and return a jitted  X -> (N, K, d_f)  forward."""
    w_cat, b_cat, s_mat, meta = prepare_disen_params(disen_weights, disen_bias)

    def forward(X):
        return _apply(X, w_cat, b_cat, s_mat, tile_n=tile_n, **meta)

    return jax.jit(forward)


def init_disen_layer(X, disen_weights, disen_bias, *, tile_n=None):
    """One-shot convenience wrapper (param prep + kernel in a single call)."""
    w_cat, b_cat, s_mat, meta = prepare_disen_params(disen_weights, disen_bias)
    return _apply(X, w_cat, b_cat, s_mat, tile_n=tile_n, **meta)


# ---------------------------------------------------------------------------
# Reference & demo
# ---------------------------------------------------------------------------
def _reference(X, W, b):
    f0 = jnp.einsum("ij,kjl->ikl", X, W) + b
    f0 = jnp.maximum(f0, 0.0)
    denom = jnp.maximum(jnp.sqrt(jnp.sum(f0 * f0, axis=1, keepdims=True)), 1e-12)
    return f0 / denom


if __name__ == "__main__":
    # Small shapes consistent with the module (d_0 == d_in, d_f = d_in // K).
    N, d_in, K = 64, 32, 4
    d_0, d_f = d_in, d_in // K

    key = jax.random.PRNGKey(0)
    kx, kw, kb = jax.random.split(key, 3)
    X = jax.random.normal(kx, (N, d_in), dtype=jnp.float32)

    # disen_weights: xavier_uniform_ on shape (K, d_0, d_in // K)
    fan_in, fan_out = d_0 * d_f, K * d_f
    bound = (6.0 / (fan_in + fan_out)) ** 0.5
    disen_weights = jax.random.uniform(
        kw, (K, d_0, d_f), dtype=jnp.float32, minval=-bound, maxval=bound
    )
    # Module inits bias to zeros; use small nonzero values to exercise the add.
    disen_bias = 0.1 * jax.random.normal(kb, (1, K, d_f), dtype=jnp.float32)

    # Params packed once; auto tile_n gives a 2-step "parallel" grid for N=64.
    forward = make_init_disen_forward(disen_weights, disen_bias)
    out = jax.block_until_ready(forward(X))

    ref = _reference(X, disen_weights, disen_bias)
    assert out.shape == (N, K, d_f)
    assert jnp.allclose(out, ref, atol=2e-5, rtol=2e-5)
    print("KERNEL_OK")
</pallas_src>

<mosaic_0001>
module attributes {stable_mosaic.version = 11 : i64} {
  func.func @_disen_kernel_smat(%arg0: i32, %arg1: memref<32x32xf32, #tpu.memory_space<vmem>>, %arg2: memref<32x128xf32, #tpu.memory_space<vmem>>, %arg3: memref<1x128xf32, #tpu.memory_space<vmem>>, %arg4: memref<128x128xf32, #tpu.memory_space<vmem>>, %arg5: memref<32x128xf32, #tpu.memory_space<vmem>>) attributes {dimension_semantics = [#tpu.dimension_semantics<parallel>], iteration_bounds = array<i64: 2>, scalar_prefetch = 0 : i64, scratch_operands = 0 : i64, tpu.core_type = #tpu.core_type<tc>, window_params = [{transform_indices = @transform_0, window_bounds = array<i64: 32, 32>}, {pipeline_mode = #tpu.pipeline_mode<synchronous>, transform_indices = @transform_1, window_bounds = array<i64: 32, 128>}, {pipeline_mode = #tpu.pipeline_mode<synchronous>, transform_indices = @transform_2, window_bounds = array<i64: 1, 128>}, {pipeline_mode = #tpu.pipeline_mode<synchronous>, transform_indices = @transform_3, window_bounds = array<i64: 128, 128>}, {transform_indices = @transform_4, window_bounds = array<i64: 32, 128>}]} {
    %c0 = arith.constant 0 : index
    %c0_0 = arith.constant 0 : index
    %0 = vector.load %arg1[%c0, %c0_0] : memref<32x32xf32, #tpu.memory_space<vmem>>, vector<32x32xf32>
    %c0_1 = arith.constant 0 : index
    %c0_2 = arith.constant 0 : index
    %1 = vector.load %arg2[%c0_1, %c0_2] : memref<32x128xf32, #tpu.memory_space<vmem>>, vector<32x128xf32>
    %cst = arith.constant dense<0.000000e+00> : vector<32x128xf32>
    %2 = tpu.matmul %0, %1, %cst {dimension_numbers = #tpu.dot_dimension_numbers<[1], [0], [0], [1], [0, 0, 1, 1], [], []>} : vector<32x32xf32>, vector<32x128xf32>, vector<32x128xf32> -> vector<32x128xf32>
    %c0_3 = arith.constant 0 : index
    %c0_4 = arith.constant 0 : index
    %3 = vector.load %arg3[%c0_3, %c0_4] : memref<1x128xf32, #tpu.memory_space<vmem>>, vector<1x128xf32>
    %4 = vector.broadcast %3 : vector<1x128xf32> to vector<32x128xf32>
    %5 = arith.addf %2, %4 : vector<32x128xf32>
    %cst_5 = arith.constant 0.000000e+00 : f32
    %6 = vector.broadcast %cst_5 : f32 to vector<32x128xf32>
    %7 = arith.maximumf %5, %6 : vector<32x128xf32>
    %8 = arith.mulf %7, %7 : vector<32x128xf32>
    %c0_6 = arith.constant 0 : index
    %c0_7 = arith.constant 0 : index
    %9 = vector.load %arg4[%c0_6, %c0_7] : memref<128x128xf32, #tpu.memory_space<vmem>>, vector<128x128xf32>
    %cst_8 = arith.constant dense<0.000000e+00> : vector<32x128xf32>
    %10 = tpu.matmul %8, %9, %cst_8 {dimension_numbers = #tpu.dot_dimension_numbers<[1], [0], [0], [1], [0, 0, 1, 1], [], []>} : vector<32x128xf32>, vector<128x128xf32>, vector<32x128xf32> -> vector<32x128xf32>
    %cst_9 = arith.constant 1.000000e-24 : f32
    %11 = vector.broadcast %cst_9 : f32 to vector<32x128xf32>
    %12 = arith.maximumf %10, %11 : vector<32x128xf32>
    %13 = math.rsqrt %12 : vector<32x128xf32>
    %14 = arith.mulf %7, %13 : vector<32x128xf32>
    %c0_10 = arith.constant 0 : index
    %c0_11 = arith.constant 0 : index
    %15 = vector.load %arg5[%c0_10, %c0_11] : memref<32x128xf32, #tpu.memory_space<vmem>>, vector<32x128xf32>
    tpu.vector_store %arg5[%c0_10, %c0_11], %14 {strides = array<i32>} : memref<32x128xf32, #tpu.memory_space<vmem>>, vector<32x128xf32>,
    return
  }
  func.func @transform_0(%arg0: i32) -> (i32, i32) {
    %c0_i32 = arith.constant 0 : i32
    %c0_i32_0 = arith.constant 0 : i32
    return %arg0, %c0_i32 : i32, i32
  }
  func.func @transform_1(%arg0: i32) -> (i32, i32) {
    %c0_i32 = arith.constant 0 : i32
    %c0_i32_0 = arith.constant 0 : i32
    %c0_i32_1 = arith.constant 0 : i32
    return %c0_i32, %c0_i32_0 : i32, i32
  }
  func.func @transform_2(%arg0: i32) -> (i32, i32) {
    %c0_i32 = arith.constant 0 : i32
    %c0_i32_0 = arith.constant 0 : i32
    %c0_i32_1 = arith.constant 0 : i32
    return %c0_i32, %c0_i32_0 : i32, i32
  }
  func.func @transform_3(%arg0: i32) -> (i32, i32) {
    %c0_i32 = arith.constant 0 : i32
    %c0_i32_0 = arith.constant 0 : i32
    %c0_i32_1 = arith.constant 0 : i32
    return %c0_i32, %c0_i32_0 : i32, i32
  }
  func.func @transform_4(%arg0: i32) -> (i32, i32) {
    %c0_i32 = arith.constant 0 : i32
    %c0_i32_0 = arith.constant 0 : i32
    return %arg0, %c0_i32 : i32, i32
  }
}

</mosaic_0001>

<llo_original>
// kernel: forward.1
$region0: #{forward.1}
  #allocation0 [shape = 'u32[]', space=smem, size = 0x4, offset = 0x4, fixed_abs, tag = 'smem constant byte address 0x4 - core index']
  #allocation1 [shape = 'u32[144,128]{1,0:T(1,128)}', space=vmem, size = 0x12000, scoped, tag = 'internal scratch']
  %s0 = inlined_call_operand.vmem [shape: f32[64,32], index: 0, kind: input, shape index: {}]
  %s1 = inlined_call_operand.vmem [shape: f32[32,128], index: 1, kind: input, shape index: {}]
  %s2 = inlined_call_operand.vmem [shape: f32[1,128], index: 2, kind: input, shape index: {}]
  %s3 = inlined_call_operand.hbm [shape: f32[128,128], index: 3, kind: input, shape index: {}]
  %s4 = inlined_call_operand.vmem [shape: f32[64,128], index: 4, kind: output, shape index: {}]
  %s5 = sld [smem:[#allocation0]]
  $region53: #{forward.1} parent=0
    _
  %s7 = ssub.s32 1, %s5
  %s8 = scalar_select 0, %s7, %s5
  $region1: #{forward.1} parent=0
    #allocation2 [shape = 'u8[65536]{0}', space=vmem, size = 0x10000, scoped, tag = 'input window, operand 3, single buffered']
    #allocation3 [shape = 's32[2]{0}', space=sflag, size = 0x8, scoped, tag = 'scoped memory for forward.1']
    %9 = vsyncpa [#allocation3], 0
    loop: start=0, step=1, limit=4
    $region2: #{forward.1} parent=1 // loop_pre_header
      _
    $region3: #{forward.1} parent=1 // loop_header
      %s11 = sphi 0, %s15
      %p12 = scmp.ge.s32.totalorder %s11, 4
      %s21 = sphi 0, %s23
      %s24 = sphi 0, %s21
      %s25 = sphi 0, %s24
      %s41 = sphi 0, %s25
      %s45 = sphi 0, %s45
      %s47 = sphi 0, %s45
      %s48 = sphi 0, %s47
      %s62 = sphi 0, %s48
      %s66 = sphi 0, %s66
      %s68 = sphi 0, %s66
      %s69 = sphi 0, %s68
      %s83 = sphi 0, %s69
      %s87 = sphi 0, %s87
      %s89 = sphi 0, %s87
      %s90 = sphi 0, %s89
      %s104 = sphi 0, %s90
      %s110 = sphi 0, %s112
      %s113 = sphi 0, %s110
      %s114 = sphi 0, %s113
      %s130 = sphi 0, %s114
    $region4: #{forward.1} parent=1 // loop_header_branch
      %14 = sbr.rel (%p12) target = $region8
    $region5: #{forward.1} parent=1 // loop_body
      %s16 = ssub.s32 %s11, 1
      %s17 = ssub.s32 %s11, 2
      %s18 = sadd.s32 %s11, 1
      %s19 = ssub.s32 %s11, %s18
      %p20 = scmp.eq.s32.totalorder %s19, 0
      %s22 = sadd.s32 %s21, 1
      %s23 = scalar_select %p20, %s21, %s22
      %p26 = pneg %p20
      %p27 = scmp.eq.s32.totalorder %s11, 1
      %p28 = por %p26, %p27
      %p29 = scmp.ne.s32.totalorder %s21, %s24
      %p30 = scmp.eq.s32.totalorder %s11, 0
      %p31 = por %p29, %p30
      %p32 = scmp.ne.s32.totalorder %s21, %s24
      %p33 = scmp.eq.s32.totalorder %s16, 1
      %p34 = por %p32, %p33
      %p35 = scmp.ne.s32.totalorder %s24, %s25
      %p36 = scmp.eq.s32.totalorder %s16, 0
      %p37 = por %p35, %p36
      %p38 = scmp.ne.s32.totalorder %s24, %s25
      %p39 = scmp.eq.s32.totalorder %s17, 1
      %p40 = por %p38, %p39
      %p42 = scmp.ne.s32.totalorder %s25, %s41
      %p43 = scmp.eq.s32.totalorder %s17, 0
      %p44 = por %p42, %p43
      %s46 = sadd.s32 %s45, 1
      %p49 = scmp.eq.s32.totalorder %s11, 1
      %p50 = scmp.ne.s32.totalorder %s45, %s47
      %p51 = scmp.eq.s32.totalorder %s11, 0
      %p52 = por %p50, %p51
      %p53 = scmp.ne.s32.totalorder %s45, %s47
      %p54 = scmp.eq.s32.totalorder %s16, 1
      %p55 = por %p53, %p54
      %p56 = scmp.ne.s32.totalorder %s47, %s48
      %p57 = scmp.eq.s32.totalorder %s16, 0
      %p58 = por %p56, %p57
      %p59 = scmp.ne.s32.totalorder %s47, %s48
      %p60 = scmp.eq.s32.totalorder %s17, 1
      %p61 = por %p59, %p60
      %p63 = scmp.ne.s32.totalorder %s48, %s62
      %p64 = scmp.eq.s32.totalorder %s17, 0
      %p65 = por %p63, %p64
      %s67 = sadd.s32 %s66, 1
      %p70 = scmp.eq.s32.totalorder %s11, 1
      %p71 = scmp.ne.s32.totalorder %s66, %s68
      %p72 = scmp.eq.s32.totalorder %s11, 0
      %p73 = por %p71, %p72
      %p74 = scmp.ne.s32.totalorder %s66, %s68
      %p75 = scmp.eq.s32.totalorder %s16, 1
      %p76 = por %p74, %p75
      %p77 = scmp.ne.s32.totalorder %s68, %s69
      %p78 = scmp.eq.s32.totalorder %s16, 0
      %p79 = por %p77, %p78
      %p80 = scmp.ne.s32.totalorder %s68, %s69
      %p81 = scmp.eq.s32.totalorder %s17, 1
      %p82 = por %p80, %p81
      %p84 = scmp.ne.s32.totalorder %s69, %s83
      %p85 = scmp.eq.s32.totalorder %s17, 0
      %p86 = por %p84, %p85
      %s88 = sadd.s32 %s87, 1
      %p91 = scmp.eq.s32.totalorder %s11, 1
      %p92 = scmp.ne.s32.totalorder %s87, %s89
      %p93 = scmp.eq.s32.totalorder %s11, 0
      %p94 = por %p92, %p93
      %p95 = scmp.ne.s32.totalorder %s87, %s89
      %p96 = scmp.eq.s32.totalorder %s16, 1
      %p97 = por %p95, %p96
      %p98 = scmp.ne.s32.totalorder %s89, %s90
      %p99 = scmp.eq.s32.totalorder %s16, 0
      %p100 = por %p98, %p99
      %p101 = scmp.ne.s32.totalorder %s89, %s90
      %p102 = scmp.eq.s32.totalorder %s17, 1
      %p103 = por %p101, %p102
      %p105 = scmp.ne.s32.totalorder %s90, %s104
      %p106 = scmp.eq.s32.totalorder %s17, 0
      %p107 = por %p105, %p106
      %s108 = ssub.s32 %s11, %s18
      %p109 = scmp.eq.s32.totalorder %s108, 0
      %s111 = sadd.s32 %s110, 1
      %s112 = scalar_select %p109, %s110, %s111
      %p115 = pneg %p109
      %p116 = scmp.eq.s32.totalorder %s11, 1
      %p117 = por %p115, %p116
      %p118 = scmp.ne.s32.totalorder %s110, %s113
      %p119 = scmp.eq.s32.totalorder %s11, 0
      %p120 = por %p118, %p119
      %p121 = scmp.ne.s32.totalorder %s110, %s113
      %p122 = scmp.eq.s32.totalorder %s16, 1
      %p123 = por %p121, %p122
      %p124 = scmp.ne.s32.totalorder %s113, %s114
      %p125 = scmp.eq.s32.totalorder %s16, 0
      %p126 = por %p124, %p125
      %p127 = scmp.ne.s32.totalorder %s113, %s114
      %p128 = scmp.eq.s32.totalorder %s17, 1
      %p129 = por %p127, %p128
      %p131 = scmp.ne.s32.totalorder %s114, %s130
      %p132 = scmp.eq.s32.totalorder %s17, 0
      %p133 = por %p131, %p132
      %p134 = scmp.le.s32.totalorder 1, %s11
      %p135 = scmp.lt.s32.totalorder %s11, 3
      %p136 = pnand %p134, %p135
      %p137 = pneg %p136
      // Predicated region
      $region9: #{forward.1} parent=5 // pred_check
        _
      $region10: #{forward.1} parent=5 // pred_check_branch
        %139 = sbr.rel (%p136) target = $region12
      $region11: #{forward.1} parent=5 // pred_region
        %s140 = ssub.s32 %s11, 1
        // Predicated region
        $region13: #{forward.1} parent=11 // pred_check
          %p141 = pneg %p58
        $region14: #{forward.1} parent=11 // pred_check_branch
          %143 = sbr.rel (%p141) target = $region16
        $region15: #{forward.1} parent=11 // pred_region
          _
        $region16: #{forward.1} parent=11 // pred_fallthru
          _
        // Predicated region
        $region17: #{forward.1} parent=11 // pred_check
          %p144 = pneg %p79
        $region18: #{forward.1} parent=11 // pred_check_branch
          %146 = sbr.rel (%p144) target = $region20
        $region19: #{forward.1} parent=11 // pred_region
          _
        $region20: #{forward.1} parent=11 // pred_fallthru
          _
        // Predicated region
        $region21: #{forward.1} parent=11 // pred_check
          %p147 = pneg %p100
        $region22: #{forward.1} parent=11 // pred_check_branch
          %149 = sbr.rel (%p147) target = $region24
        $region23: #{forward.1} parent=11 // pred_region
          %s151 = ssub.s32 2048, 2048
          %152 = vsyncadd [#allocation3], %s151
          %s153 = sshll.u32 [#allocation2], 4
          %s154 = int_to_ptr.vmem [resolvable:$true] %s153
          %159 = dma.hbm_to_vmem [thread:$0]  %s3, 2048, %s154, [#allocation3], 128, 128, 8
        $region24: #{forward.1} parent=11 // pred_fallthru
          _
      $region12: #{forward.1} parent=5 // pred_fallthru
        _
      %p160 = scmp.lt.s32.totalorder %s11, 2
      // Predicated region
      $region25: #{forward.1} parent=5 // pred_check
        %p161 = pneg %p160
      $region26: #{forward.1} parent=5 // pred_check_branch
        %163 = sbr.rel (%p161) target = $region28
      $region27: #{forward.1} parent=5 // pred_region
        // Predicated region
        $region29: #{forward.1} parent=27 // pred_check
          %p164 = pneg %p31
        $region30: #{forward.1} parent=27 // pred_check_branch
          %166 = sbr.rel (%p164) target = $region32
        $region31: #{forward.1} parent=27 // pred_region
          %s167 = smul.u32 4, %s11
          %p168 = scmp.lt.s32.totalorder %s167, 7
          %s169 = scalar_select %p168, %s167, 7
          %s170 = smul.addr %s169, 8
          %s171 = scalar_lea.vmem %s0, %s170
          %s172 = smul.u32 4, %s11
        $region32: #{forward.1} parent=27 // pred_fallthru
          _
      $region28: #{forward.1} parent=5 // pred_fallthru
        _
      %p173 = scmp.le.s32.totalorder 1, %s11
      %p174 = scmp.lt.s32.totalorder %s11, 3
      %p175 = pnand %p173, %p174
      %p176 = pneg %p175
      // Predicated region
      $region33: #{forward.1} parent=5 // pred_check
        _
      $region34: #{forward.1} parent=5 // pred_check_branch
        %178 = sbr.rel (%p175) target = $region36
      $region35: #{forward.1} parent=5 // pred_region
        %s179 = ssub.s32 %s11, 1
        // Predicated region
        $region37: #{forward.1} parent=35 // pred_check
          %p180 = pneg %p100
        $region38: #{forward.1} parent=35 // pred_check_branch
          %182 = sbr.rel (%p180) target = $region40
        $region39: #{forward.1} parent=35 // pred_region
          %183 = dma.done [#allocation3], 2048
        $region40: #{forward.1} parent=35 // pred_fallthru
          _
        %s184 = smul.u32 4, %s16
        %p185 = scmp.lt.s32.totalorder %s184, 7
        %s186 = scalar_select %p185, %s184, 7
        %s187 = smul.addr %s186, 8
        %s188 = scalar_lea.vmem %s0, %s187
        %p189 = pneg %p37
        %p190 = pneg %p34
        %p191 = pneg %p58
        %p192 = pneg %p55
        %p193 = pneg %p79
        %p194 = pneg %p76
        %p195 = pneg %p100
        %p196 = pneg %p97
        %p197 = pneg %p126
        %p198 = pneg %p123
        %s199 = smul.u32 4, %s16
        %p200 = scmp.lt.s32.totalorder %s199, 7
        %s201 = scalar_select %p200, %s199, 7
        %s202 = smul.addr %s201, 8
        %s203 = scalar_lea.vmem %s4, %s202
        %s204 = smul.u32 4, %s16
        %p205 = scmp.lt.s32.totalorder %s204, 7
        %s206 = scalar_select %p205, %s204, 7
        %s207 = smul.addr %s206, 8
        %s208 = scalar_lea.vmem %s0, %s207
        %s209 = smul.u32 4, %s16
        %s210 = smul.u32 4, %s16
        %p211 = scmp.lt.s32.totalorder %s210, 7
        %s212 = scalar_select %p211, %s210, 7
        %s213 = smul.addr %s212, 8
        %s214 = scalar_lea.vmem %s4, %s213
        %s215 = smul.u32 4, %s16
        %v216 = vld [vmem:[%s208] sm:$0xff]
        %v217 = vld [vmem:[%s208 + $0x8] sm:$0xff]
        %v218 = vld [vmem:[%s208 + $0x10] sm:$0xff]
        %v219 = vld [vmem:[%s208 + $0x18] sm:$0xff]
        %v220 = vld [vmem:[%s1] sm:$0xff]
        %v221 = vld [vmem:[%s1 + $0x8] sm:$0xff]
        %v222 = vld [vmem:[%s1 + $0x10] sm:$0xff]
        %v223 = vld [vmem:[%s1 + $0x18] sm:$0xff]
        %v224 = vld [vmem:[%s2] sm:$0x1]
        %v226 = vlaneseq
        %v227 = vshrl.u32 %v226, 7
        %v228 = vsub.s32 0, %v227
        %v229 = vrot.slane %v224, %v228
        %vm231 = vcmask 261120
        %v233 = vsel %vm231, %v216, 0
        %v236 = vsel %vm231, %v217, 0
        %v239 = vsel %vm231, %v218, 0
        %v242 = vsel %vm231, %v219, 0
        %244 = vmatprep.subr.mxu0 0.0
        %245 = vmatpush1.msra.mxu0 %v220
        %246 = vmatprep.subr.mxu0 0.0
        %247 = vmatpush1.msra.mxu0 %v221
        %248 = vmatprep.subr.mxu0 0.0
        %249 = vmatpush1.msra.mxu0 %v222
        %250 = vmatprep.subr.mxu0 0.0
        %251 = vmatpush1.msra.mxu0 %v223
        %252 = vmatprep.subr.mxu0 0.0
        %253 = vmatpush1.msra.mxu0 0.0
        %254 = vmatprep.subr.mxu0 0.0
        %255 = vmatpush1.msra.mxu0 0.0
        %256 = vmatprep.subr.mxu0 0.0
        %257 = vmatpush1.msra.mxu0 0.0
        %258 = vmatprep.subr.mxu0 0.0
        %259 = vmatpush1.msra.mxu0 0.0
        %260 = vmatprep.subr.mxu0 0.0
        %261 = vmatpush1.msra.mxu0 0.0
        %262 = vmatprep.subr.mxu0 0.0
        %263 = vmatpush1.msra.mxu0 0.0
        %264 = vmatprep.subr.mxu0 0.0
        %265 = vmatpush1.msra.mxu0 0.0
        %266 = vmatprep.subr.mxu0 0.0
        %267 = vmatpush1.msra.mxu0 0.0
        %268 = vmatprep.subr.mxu0 0.0
        %269 = vmatpush1.msra.mxu0 0.0
        %270 = vmatprep.subr.mxu0 0.0
        %271 = vmatpush1.msra.mxu0 0.0
        %272 = vmatprep.subr.mxu0 0.0
        %273 = vmatpush1.msra.mxu0 0.0
        %274 = vmatprep.subr.mxu0 0.0
        %275 = vmatpush1.msra.mxu0 0.0
        %276 = vmatprep.subr.mxu0 0.0
        %277 = vmatpush1.msra.mxu0 0.0
        %278 = vmatprep.subr.mxu0 0.0
        %279 = vmatpush1.msra.mxu0 0.0
        %280 = vmatprep.subr.mxu0 0.0
        %281 = vmatpush1.msra.mxu0 0.0
        %282 = vmatprep.subr.mxu0 0.0
        %283 = vmatpush1.msra.mxu0 0.0
        %284 = vmatprep.subr.mxu0 0.0
        %285 = vmatpush1.msra.mxu0 0.0
        %286 = vmatprep.subr.mxu0 0.0
        %287 = vmatpush1.msra.mxu0 0.0
        %288 = vmatprep.subr.mxu0 0.0
        %289 = vmatpush1.msra.mxu0 0.0
        %290 = vmatprep.subr.mxu0 0.0
        %291 = vmatpush1.msra.mxu0 0.0
        %292 = vmatprep.subr.mxu0 0.0
        %293 = vmatpush1.msra.mxu0 0.0
        %294 = vmatprep.subr.mxu0 0.0
        %295 = vmatpush1.msra.mxu0 0.0
        %296 = vmatprep.subr.mxu0 0.0
        %297 = vmatpush1.msra.mxu0 0.0
        %298 = vmatprep.subr.mxu0 0.0
        %299 = vmatpush1.msra.mxu0 0.0
        %300 = vmatprep.subr.mxu0 0.0
        %301 = vmatpush1.msra.mxu0 0.0
        %302 = vmatprep.subr.mxu0 0.0
        %303 = vmatpush1.msra.mxu0 0.0
        %304 = vmatprep.subr.mxu0 0.0
        %305 = vmatpush1.msra.mxu0 0.0
        %306 = vmatprep.subr.mxu0 0.0
        %307 = vmatpush1.msra.mxu0 0.0
        %308 = vmatprep.mubr.f32.mxu0 0.0
        %309 = vmatmul.mubr.f32.gmra.mrb[0].mxu0 %v233
        %v310 = vpop.f32.mrb[0].mxu0
        %v311 = vadd.f32 %v229, %v310
        %v312 = vpop.f32.mrb[0].mxu0
        %313 = vmatprep.mubr.f32.mxu0 0.0
        %314 = vmatmul.mubr.f32.gmra.mrb[0].mxu0 %v236
        %v315 = vpop.f32.mrb[0].mxu0
        %v316 = vadd.f32 %v229, %v315
        %v317 = vpop.f32.mrb[0].mxu0
        %318 = vmatprep.mubr.f32.mxu0 0.0
        %319 = vmatmul.mubr.f32.gmra.mrb[0].mxu0 %v239
        %v320 = vpop.f32.mrb[0].mxu0
        %v321 = vadd.f32 %v229, %v320
        %v322 = vpop.f32.mrb[0].mxu0
        %323 = vmatprep.mubr.f32.mxu0 0.0
        %324 = vmatmul.mubr.f32.gmra.mrb[0].mxu0 %v242
        %v325 = vpop.f32.mrb[0].mxu0
        %v326 = vadd.f32 %v229, %v325
        %v327 = vpop.f32.mrb[0].mxu0
        %328 = vdwg.mxu0
        %v329 = vmax.f32 %v311, 0.0
        %v330 = vmax.f32 %v316, 0.0
        %v331 = vmax.f32 %v321, 0.0
        %v332 = vmax.f32 %v326, 0.0
        %v333 = vmul.f32 %v329, %v329
        %v334 = vmul.f32 %v330, %v330
        %v335 = vmul.f32 %v331, %v331
        %v336 = vmul.f32 %v332, %v332
        %v337 = vld [vmem:[#allocation2] sm:$0xff]
        %v338 = vld [vmem:[#allocation2 + $0x8] sm:$0xff]
        %v339 = vld [vmem:[#allocation2 + $0x10] sm:$0xff]
        %v340 = vld [vmem:[#allocation2 + $0x18] sm:$0xff]
        %v341 = vld [vmem:[#allocation2 + $0x20] sm:$0xff]
        %v342 = vld [vmem:[#allocation2 + $0x28] sm:$0xff]
        %v343 = vld [vmem:[#allocation2 + $0x30] sm:$0xff]
        %v344 = vld [vmem:[#allocation2 + $0x38] sm:$0xff]
        %v345 = vld [vmem:[#allocation2 + $0x40] sm:$0xff]
        %v346 = vld [vmem:[#allocation2 + $0x48] sm:$0xff]
        %v347 = vld [vmem:[#allocation2 + $0x50] sm:$0xff]
        %v348 = vld [vmem:[#allocation2 + $0x58] sm:$0xff]
        %v349 = vld [vmem:[#allocation2 + $0x60] sm:$0xff]
        %v350 = vld [vmem:[#allocation2 + $0x68] sm:$0xff]
        %v351 = vld [vmem:[#allocation2 + $0x70] sm:$0xff]
        %v352 = vld [vmem:[#allocation2 + $0x78] sm:$0xff]
        %353 = vmatprep.subr.mxu0 0.0
        %354 = vmatpush1.msra.mxu0 %v337
        %355 = vmatprep.subr.mxu0 0.0
        %356 = vmatpush1.msra.mxu0 %v338
        %357 = vmatprep.subr.mxu0 0.0
        %358 = vmatpush1.msra.mxu0 %v339
        %359 = vmatprep.subr.mxu0 0.0
        %360 = vmatpush1.msra.mxu0 %v340
        %361 = vmatprep.subr.mxu0 0.0
        %362 = vmatpush1.msra.mxu0 %v341
        %363 = vmatprep.subr.mxu0 0.0
        %364 = vmatpush1.msra.mxu0 %v342
        %365 = vmatprep.subr.mxu0 0.0
        %366 = vmatpush1.msra.mxu0 %v343
        %367 = vmatprep.subr.mxu0 0.0
        %368 = vmatpush1.msra.mxu0 %v344
        %369 = vmatprep.subr.mxu0 0.0
        %370 = vmatpush1.msra.mxu0 %v345
        %371 = vmatprep.subr.mxu0 0.0
        %372 = vmatpush1.msra.mxu0 %v346
        %373 = vmatprep.subr.mxu0 0.0
        %374 = vmatpush1.msra.mxu0 %v347
        %375 = vmatprep.subr.mxu0 0.0
        %376 = vmatpush1.msra.mxu0 %v348
        %377 = vmatprep.subr.mxu0 0.0
        %378 = vmatpush1.msra.mxu0 %v349
        %379 = vmatprep.subr.mxu0 0.0
        %380 = vmatpush1.msra.mxu0 %v350
        %381 = vmatprep.subr.mxu0 0.0
        %382 = vmatpush1.msra.mxu0 %v351
        %383 = vmatprep.subr.mxu0 0.0
        %384 = vmatpush1.msra.mxu0 %v352
        %385 = vmatprep.subr.mxu0 0.0
        %386 = vmatpush1.msra.mxu0 0.0
        %387 = vmatprep.subr.mxu0 0.0
        %388 = vmatpush1.msra.mxu0 0.0
        %389 = vmatprep.subr.mxu0 0.0
        %390 = vmatpush1.msra.mxu0 0.0
        %391 = vmatprep.subr.mxu0 0.0
        %392 = vmatpush1.msra.mxu0 0.0
        %393 = vmatprep.subr.mxu0 0.0
        %394 = vmatpush1.msra.mxu0 0.0
        %395 = vmatprep.subr.mxu0 0.0
        %396 = vmatpush1.msra.mxu0 0.0
        %397 = vmatprep.subr.mxu0 0.0
        %398 = vmatpush1.msra.mxu0 0.0
        %399 = vmatprep.subr.mxu0 0.0
        %400 = vmatpush1.msra.mxu0 0.0
        %401 = vmatprep.subr.mxu0 0.0
        %402 = vmatpush1.msra.mxu0 0.0
        %403 = vmatprep.subr.mxu0 0.0
        %404 = vmatpush1.msra.mxu0 0.0
        %405 = vmatprep.subr.mxu0 0.0
        %406 = vmatpush1.msra.mxu0 0.0
        %407 = vmatprep.subr.mxu0 0.0
        %408 = vmatpush1.msra.mxu0 0.0
        %409 = vmatprep.subr.mxu0 0.0
        %410 = vmatpush1.msra.mxu0 0.0
        %411 = vmatprep.subr.mxu0 0.0
        %412 = vmatpush1.msra.mxu0 0.0
        %413 = vmatprep.subr.mxu0 0.0
        %414 = vmatpush1.msra.mxu0 0.0
        %415 = vmatprep.subr.mxu0 0.0
        %416 = vmatpush1.msra.mxu0 0.0
        %417 = vmatprep.mubr.f32.mxu0 0.0
        %418 = vmatmul.mubr.f32.gmra.mrb[0].mxu0 %v333
        %v419 = vpop.f32.mrb[0].mxu0
        %v420 = vadd.f32 0.0, %v419
        %v421 = vpop.f32.mrb[0].mxu0
        %422 = vmatprep.mubr.f32.mxu0 0.0
        %423 = vmatmul.mubr.f32.gmra.mrb[0].mxu0 %v334
        %v424 = vpop.f32.mrb[0].mxu0
        %v425 = vadd.f32 0.0, %v424
        %v426 = vpop.f32.mrb[0].mxu0
        %427 = vmatprep.mubr.f32.mxu0 0.0
        %428 = vmatmul.mubr.f32.gmra.mrb[0].mxu0 %v335
        %v429 = vpop.f32.mrb[0].mxu0
        %v430 = vadd.f32 0.0, %v429
        %v431 = vpop.f32.mrb[0].mxu0
        %432 = vmatprep.mubr.f32.mxu0 0.0
        %433 = vmatmul.mubr.f32.gmra.mrb[0].mxu0 %v336
        %v434 = vpop.f32.mrb[0].mxu0
        %v435 = vadd.f32 0.0, %v434
        %v436 = vpop.f32.mrb[0].mxu0
        %437 = vdwg.mxu0
        %v438 = vmax.f32 %v420, 1e-24
        %v439 = vmax.f32 %v425, 1e-24
        %v440 = vmax.f32 %v430, 1e-24
        %v441 = vmax.f32 %v435, 1e-24
        %v442 = vrsqrt.pop %v438
        %v443 = vrsqrt.pop %v439
        %v444 = vrsqrt.pop %v440
        %v445 = vrsqrt.pop %v441
        %v446 = vmul.f32 %v329, %v442
        %v447 = vmul.f32 %v330, %v443
        %v448 = vmul.f32 %v331, %v444
        %v449 = vmul.f32 %v332, %v445
        %450 = vst [vmem:[%s214] sm:$0xff] %v446
        %451 = vst [vmem:[%s214 + $0x8] sm:$0xff] %v447
        %452 = vst [vmem:[%s214 + $0x10] sm:$0xff] %v448
        %453 = vst [vmem:[%s214 + $0x18] sm:$0xff] %v449
        %s454 = smul.u32 4, %s16
        %p455 = scmp.lt.s32.totalorder %s454, 7
        %s456 = scalar_select %p455, %s454, 7
        %s457 = smul.addr %s456, 8
        %s458 = scalar_lea.vmem %s4, %s457
        // Predicated region
        $region41: #{forward.1} parent=35 // pred_check
          %p459 = pneg %p123
        $region42: #{forward.1} parent=35 // pred_check_branch
          %461 = sbr.rel (%p459) target = $region44
        $region43: #{forward.1} parent=35 // pred_region
          %s462 = smul.u32 4, %s16
        $region44: #{forward.1} parent=35 // pred_fallthru
          _
      $region36: #{forward.1} parent=5 // pred_fallthru
        _
      %p463 = scmp.le.s32.totalorder 2, %s11
      // Predicated region
      $region45: #{forward.1} parent=5 // pred_check
        %p464 = pneg %p463
      $region46: #{forward.1} parent=5 // pred_check_branch
        %466 = sbr.rel (%p464) target = $region48
      $region47: #{forward.1} parent=5 // pred_region
        %s467 = ssub.s32 %s11, 2
        // Predicated region
        $region49: #{forward.1} parent=47 // pred_check
          %p468 = pneg %p129
        $region50: #{forward.1} parent=47 // pred_check_branch
          %470 = sbr.rel (%p468) target = $region52
        $region51: #{forward.1} parent=47 // pred_region
          %s471 = smul.u32 4, %s17
          %p472 = scmp.lt.s32.totalorder %s471, 7
          %s473 = scalar_select %p472, %s471, 7
          %s474 = smul.addr %s473, 8
          %s475 = scalar_lea.vmem %s4, %s474
        $region52: #{forward.1} parent=47 // pred_fallthru
          _
      $region48: #{forward.1} parent=5 // pred_fallthru
        _
    $region6: #{forward.1} parent=1 // loop_footer
      %s15 = sadd.s32 1, %s11
    $region7: #{forward.1} parent=1 // loop_footer_branch
      %10 = sbr.rel target = $region3
    $region8: #{forward.1} parent=1 // loop_exit
      _
    %476 = vsyncpa [#allocation3], 1
    %s477 = scalar_lea.sflag [#allocation3], 1
    %478 = vsyncpa %s477, 1

</llo_original>
